<compile_context>
chip_gen: v7x
topology: tpu7x:2x2x1
jax: 0.10.0
libtpu: 0.0.40
codegen_flags: <defaults>
</compile_context>

<pallas_src>
import functools

import jax
import jax.numpy as jnp
from jax.experimental import pallas as pl
from jax.experimental.pallas import tpu as pltpu

PACK = 4  # batch rows lane-packed per vreg row


# --------------------------------------------------------------------------
# Kernel
# --------------------------------------------------------------------------
def embedding_kernel(x_ref,    # (TMQ, PACK*(E+8+1))   fused, lane-packed input
                     wg_ref,   # (3, PACK*(E+8+1), PACK*2H)  gates i, g, o
                     wo_ref,   # (PACK*2H, PACK*E)
                     bo_ref,   # (1, PACK*E)
                     out_ref): # (TMQ, PACK*E)
    x = x_ref[...]
    # Gate biases are folded into the last row of each block (ones-lane in x).
    i = jax.nn.sigmoid(jnp.dot(x, wg_ref[0], preferred_element_type=jnp.float32))
    g = jnp.tanh(jnp.dot(x, wg_ref[1], preferred_element_type=jnp.float32))
    o = jax.nn.sigmoid(jnp.dot(x, wg_ref[2], preferred_element_type=jnp.float32))
    # c0 == 0  ->  c = i*g (forget gate dead, omitted).  h = [h1 | h2] packed.
    h = o * jnp.tanh(i * g)                                   # (TMQ, PACK*2H)
    out_ref[...] = jnp.tanh(
        jnp.dot(h, wo_ref[...], preferred_element_type=jnp.float32) + bo_ref[...])


# --------------------------------------------------------------------------
# One-time parameter preparation (hoisted out of the hot path)
# --------------------------------------------------------------------------
def prepare_params(params, pack=PACK):
    """Torch-layout params -> fused, bias-folded, 4x block-diag kernel weights."""
    H = params["hidden_dim"]
    E = params["w_ih1"].shape[1]
    IN2 = params["w_ih2"].shape[1]      # 8
    KIN = E + IN2 + 1                   # fused input width (incl. ones-lane)

    w1t = params["w_ih1"].T.astype(jnp.float32)              # (E, 4H)
    w2t = params["w_ih2"].T.astype(jnp.float32)              # (8, 4H)
    b1 = (params["b_ih1"] + params["b_hh1"]).astype(jnp.float32)   # (4H,)
    b2 = (params["b_ih2"] + params["b_hh2"]).astype(jnp.float32)   # (4H,)

    def fused_gate(k):
        # Block-diagonal fused gate weight + bias row: (E+8+1, 2H).
        w = jnp.zeros((KIN, 2 * H), jnp.float32)
        w = w.at[:E, :H].set(w1t[:, k * H:(k + 1) * H])
        w = w.at[E:E + IN2, H:].set(w2t[:, k * H:(k + 1) * H])
        w = w.at[E + IN2, :H].set(b1[k * H:(k + 1) * H])
        w = w.at[E + IN2, H:].set(b2[k * H:(k + 1) * H])
        return w

    def blockdiag(w, p):
        r, c = w.shape
        out = jnp.zeros((p * r, p * c), w.dtype)
        for j in range(p):
            out = out.at[j * r:(j + 1) * r, j * c:(j + 1) * c].set(w)
        return out

    # torch gate order in W_ih is [i, f, g, o]; drop f (dead: c0 == 0).
    gates = [fused_gate(k) for k in (0, 2, 3)]                # i, g, o
    wg = jnp.stack([blockdiag(w, pack) for w in gates])       # (3, p*KIN, p*2H)

    wout = params["w_out"].T.astype(jnp.float32)              # (2H, E)
    wo = blockdiag(wout, pack)                                 # (p*2H, p*E)
    bo = jnp.tile(params["b_out"].astype(jnp.float32).reshape(1, E),
                  (1, pack))                                   # (1, p*E)
    return {"wg": wg, "wo": wo, "bo": bo}


# --------------------------------------------------------------------------
# Wrappers
# --------------------------------------------------------------------------
def _round_up(x, m):
    return ((x + m - 1) // m) * m


@functools.partial(jax.jit, static_argnames=("block_b",))
def embedding_forward_batched(input_tensors, input_embeddings, prepared,
                              block_b: int = 4096):
    """input_tensors: (B, 8), input_embeddings: (B, E) -> (B, E) float32."""
    B, IN2 = input_tensors.shape
    E = input_embeddings.shape[1]

    wg, wo, bo = prepared["wg"], prepared["wo"], prepared["bo"]
    KIN = E + IN2 + 1
    K4 = wg.shape[1]                    # pack * KIN
    N4 = wg.shape[2]                    # pack * 2H
    OUT4 = wo.shape[1]                  # pack * E
    pack = K4 // KIN

    # Fused input with ones-lane (gate biases folded into the weights).
    x = jnp.concatenate(
        [input_embeddings.astype(jnp.float32),
         input_tensors.astype(jnp.float32),
         jnp.ones((B, 1), jnp.float32)], axis=1)              # (B, KIN)

    # Packed-row tiling: pack rows/vreg-row, tile a multiple of 8 sublanes.
    Bq = pl.cdiv(B, pack)                                     # packed rows needed
    tmq = min(max(block_b // pack, 8), _round_up(Bq, 8))
    tmq = _round_up(tmq, 8)
    Bqp = _round_up(Bq, tmq)                                  # padded packed rows
    Bp = Bqp * pack                                           # padded batch rows
    if Bp != B:
        x = jnp.pad(x, ((0, Bp - B), (0, 0)))
    xq = x.reshape(Bqp, pack * KIN)                           # free row-major reshape

    # VMEM estimate: only raise the scoped limit when a huge tile needs it
    # (v5e default is 16 MiB; v6e/v7x default is 32 MiB).
    weight_bytes = 4 * (wg.size + wo.size + bo.size)
    step_bytes = 2 * weight_bytes + 2 * 4 * (tmq * K4 + tmq * OUT4)
    vmem_limit = int(step_bytes * 1.5) if step_bytes > 12 * (1 << 20) else None

    out_q = pl.pallas_call(
        embedding_kernel,
        out_shape=jax.ShapeDtypeStruct((Bqp, OUT4), jnp.float32),
        grid=(Bqp // tmq,),
        in_specs=[
            pl.BlockSpec((tmq, K4), lambda b: (b, 0)),        # packed input
            pl.BlockSpec(wg.shape, lambda b: (0, 0, 0)),      # VMEM-resident weights
            pl.BlockSpec(wo.shape, lambda b: (0, 0)),
            pl.BlockSpec(bo.shape, lambda b: (0, 0)),
        ],
        out_specs=pl.BlockSpec((tmq, OUT4), lambda b: (b, 0)),  # 128-lane dense stores
        compiler_params=pltpu.CompilerParams(
            dimension_semantics=("parallel",),
            vmem_limit_bytes=vmem_limit),
    )(xq, wg, wo, bo)

    # Free row-major un-pack, then drop padding rows.
    return out_q.reshape(Bp, E)[:B]


@jax.jit
def embedding_function_forward(input_tensor, input_embedding, params):
    """Single-example path, same signature as the torch forward: (8,), (E,) -> (E,).

    Per the performance review, a single example is far below Pallas launch
    cost, so this uses plain (jitted, XLA-fused) JAX.
    """
    return _reference_forward(input_tensor, input_embedding, params)


# --------------------------------------------------------------------------
# Pure-JAX reference (mirrors the torch forward) + synthetic init
# --------------------------------------------------------------------------
def _reference_forward(input_tensor, input_embedding, params):
    def cell(x, w_ih, b_ih, b_hh):
        gates = x @ w_ih.T + b_ih + b_hh
        i, f, g, o = jnp.split(gates, 4)
        i, f, o = jax.nn.sigmoid(i), jax.nn.sigmoid(f), jax.nn.sigmoid(o)
        g = jnp.tanh(g)
        c = i * g                      # c0 == 0
        return o * jnp.tanh(c)

    h1 = cell(input_embedding, params["w_ih1"], params["b_ih1"], params["b_hh1"])
    h2 = cell(input_tensor, params["w_ih2"], params["b_ih2"], params["b_hh2"])
    combined = jnp.concatenate([h1, h2])
    return jnp.tanh(params["w_out"] @ combined + params["b_out"])


def init_params(key, embedding_input_dim, hidden_dim):
    """Deterministic synthetic init with torch-like shapes (uniform +-1/sqrt(H))."""
    ks = jax.random.split(key, 8)
    s = 1.0 / jnp.sqrt(jnp.float32(hidden_dim))
    u = lambda k, shape: jax.random.uniform(k, shape, jnp.float32, -s, s)
    return {
        "hidden_dim": hidden_dim,
        # lstm_layer1: LSTM(embedding_input_dim, hidden_dim)
        "w_ih1": u(ks[0], (4 * hidden_dim, embedding_input_dim)),
        "b_ih1": u(ks[1], (4 * hidden_dim,)),
        "b_hh1": u(ks[2], (4 * hidden_dim,)),
        # lstm_layer2: LSTM(8, hidden_dim)
        "w_ih2": u(ks[3], (4 * hidden_dim, 8)),
        "b_ih2": u(ks[4], (4 * hidden_dim,)),
        "b_hh2": u(ks[5], (4 * hidden_dim,)),
        # output_layer: Linear(2*hidden_dim, embedding_input_dim)
        "w_out": u(ks[6], (embedding_input_dim, 2 * hidden_dim)),
        "b_out": u(ks[7], (embedding_input_dim,)),
        # weight_hh_l0 of both LSTMs never affects the output (h0 == 0,
        # seq_len == 1), so it is intentionally omitted.
    }


if __name__ == "__main__":
    E, H = 32, 32            # embedding_input_dim, hidden_dim
    B = 200                  # exercises lane-packing, padding, tile rounding

    key = jax.random.PRNGKey(0)
    k_params, k_emb, k_inp = jax.random.split(key, 3)

    params = init_params(k_params, E, H)
    prepared = prepare_params(params)

    input_embeddings = jax.random.normal(k_emb, (B, E), jnp.float32)
    input_tensors = jax.random.normal(k_inp, (B, 8), jnp.float32)

    # Batched path (one pallas_call for all B pairs).
    out_b = embedding_forward_batched(input_tensors, input_embeddings, prepared,
                                      block_b=4096)
    out_b = jax.block_until_ready(out_b)
    ref_b = jax.vmap(lambda t, e: _reference_forward(t, e, params))(
        input_tensors, input_embeddings)
    assert out_b.shape == (B, E)
    assert jnp.allclose(out_b, ref_b, atol=1e-5, rtol=1e-5), "batched mismatch"

    # Single-example path (same signature as the torch module's forward).
    out1 = embedding_function_forward(input_tensors[0], input_embeddings[0], params)
    out1 = jax.block_until_ready(out1)
    ref1 = _reference_forward(input_tensors[0], input_embeddings[0], params)
    assert out1.shape == (E,)
    assert jnp.allclose(out1, ref1, atol=1e-5, rtol=1e-5), "single mismatch"

    print("KERNEL_OK")
</pallas_src>

<mosaic_0001>
module attributes {stable_mosaic.version = 11 : i64} {
  func.func @embedding_kernel(%arg0: i32, %arg1: memref<56x164xf32, #tpu.memory_space<vmem>>, %arg2: memref<3x164x256xf32, #tpu.memory_space<vmem>>, %arg3: memref<256x128xf32, #tpu.memory_space<vmem>>, %arg4: memref<1x128xf32, #tpu.memory_space<vmem>>, %arg5: memref<56x128xf32, #tpu.memory_space<vmem>>) attributes {dimension_semantics = [#tpu.dimension_semantics<parallel>], iteration_bounds = array<i64: 1>, scalar_prefetch = 0 : i64, scratch_operands = 0 : i64, tpu.core_type = #tpu.core_type<tc>, window_params = [{transform_indices = @transform_0, window_bounds = array<i64: 56, 164>}, {pipeline_mode = #tpu.pipeline_mode<synchronous>, transform_indices = @transform_1, window_bounds = array<i64: 3, 164, 256>}, {pipeline_mode = #tpu.pipeline_mode<synchronous>, transform_indices = @transform_2, window_bounds = array<i64: 256, 128>}, {pipeline_mode = #tpu.pipeline_mode<synchronous>, transform_indices = @transform_3, window_bounds = array<i64: 1, 128>}, {transform_indices = @transform_4, window_bounds = array<i64: 56, 128>}]} {
    %c0 = arith.constant 0 : index
    %c0_0 = arith.constant 0 : index
    %0 = vector.load %arg1[%c0, %c0_0] : memref<56x164xf32, #tpu.memory_space<vmem>>, vector<56x164xf32>
    %c0_1 = arith.constant 0 : index
    %c0_2 = arith.constant 0 : index
    %c0_3 = arith.constant 0 : index
    %1 = vector.load %arg2[%c0_1, %c0_2, %c0_3] : memref<3x164x256xf32, #tpu.memory_space<vmem>>, vector<1x164x256xf32>
    %2 = vector.shape_cast %1 : vector<1x164x256xf32> to vector<164x256xf32>
    %cst = arith.constant dense<0.000000e+00> : vector<56x256xf32>
    %3 = tpu.matmul %0, %2, %cst {dimension_numbers = #tpu.dot_dimension_numbers<[1], [0], [0], [1], [0, 0, 1, 1], [], []>} : vector<56x164xf32>, vector<164x256xf32>, vector<56x256xf32> -> vector<56x256xf32>
    %4 = arith.negf %3 : vector<56x256xf32>
    %5 = math.exp %4 : vector<56x256xf32>
    %cst_4 = arith.constant 1.000000e+00 : f32
    %6 = vector.broadcast %cst_4 : f32 to vector<56x256xf32>
    %7 = arith.addf %6, %5 : vector<56x256xf32>
    %8 = arith.divf %6, %7 : vector<56x256xf32>
    %c1 = arith.constant 1 : index
    %c0_5 = arith.constant 0 : index
    %c0_6 = arith.constant 0 : index
    %9 = vector.load %arg2[%c1, %c0_5, %c0_6] : memref<3x164x256xf32, #tpu.memory_space<vmem>>, vector<1x164x256xf32>
    %10 = vector.shape_cast %9 : vector<1x164x256xf32> to vector<164x256xf32>
    %cst_7 = arith.constant dense<0.000000e+00> : vector<56x256xf32>
    %11 = tpu.matmul %0, %10, %cst_7 {dimension_numbers = #tpu.dot_dimension_numbers<[1], [0], [0], [1], [0, 0, 1, 1], [], []>} : vector<56x164xf32>, vector<164x256xf32>, vector<56x256xf32> -> vector<56x256xf32>
    %12 = math.tanh %11 : vector<56x256xf32>
    %c2 = arith.constant 2 : index
    %c0_8 = arith.constant 0 : index
    %c0_9 = arith.constant 0 : index
    %13 = vector.load %arg2[%c2, %c0_8, %c0_9] : memref<3x164x256xf32, #tpu.memory_space<vmem>>, vector<1x164x256xf32>
    %14 = vector.shape_cast %13 : vector<1x164x256xf32> to vector<164x256xf32>
    %cst_10 = arith.constant dense<0.000000e+00> : vector<56x256xf32>
    %15 = tpu.matmul %0, %14, %cst_10 {dimension_numbers = #tpu.dot_dimension_numbers<[1], [0], [0], [1], [0, 0, 1, 1], [], []>} : vector<56x164xf32>, vector<164x256xf32>, vector<56x256xf32> -> vector<56x256xf32>
    %16 = arith.negf %15 : vector<56x256xf32>
    %17 = math.exp %16 : vector<56x256xf32>
    %cst_11 = arith.constant 1.000000e+00 : f32
    %18 = vector.broadcast %cst_11 : f32 to vector<56x256xf32>
    %19 = arith.addf %18, %17 : vector<56x256xf32>
    %20 = arith.divf %18, %19 : vector<56x256xf32>
    %21 = arith.mulf %8, %12 : vector<56x256xf32>
    %22 = math.tanh %21 : vector<56x256xf32>
    %23 = arith.mulf %20, %22 : vector<56x256xf32>
    %c0_12 = arith.constant 0 : index
    %c0_13 = arith.constant 0 : index
    %24 = vector.load %arg3[%c0_12, %c0_13] : memref<256x128xf32, #tpu.memory_space<vmem>>, vector<256x128xf32>
    %cst_14 = arith.constant dense<0.000000e+00> : vector<56x128xf32>
    %25 = tpu.matmul %23, %24, %cst_14 {dimension_numbers = #tpu.dot_dimension_numbers<[1], [0], [0], [1], [0, 0, 1, 1], [], []>} : vector<56x256xf32>, vector<256x128xf32>, vector<56x128xf32> -> vector<56x128xf32>
    %c0_15 = arith.constant 0 : index
    %c0_16 = arith.constant 0 : index
    %26 = vector.load %arg4[%c0_15, %c0_16] : memref<1x128xf32, #tpu.memory_space<vmem>>, vector<1x128xf32>
    %27 = vector.broadcast %26 : vector<1x128xf32> to vector<56x128xf32>
    %28 = arith.addf %25, %27 : vector<56x128xf32>
    %29 = math.tanh %28 : vector<56x128xf32>
    %c0_17 = arith.constant 0 : index
    %c0_18 = arith.constant 0 : index
    %30 = vector.load %arg5[%c0_17, %c0_18] : memref<56x128xf32, #tpu.memory_space<vmem>>, vector<56x128xf32>
    tpu.vector_store %arg5[%c0_17, %c0_18], %29 {strides = array<i32>} : memref<56x128xf32, #tpu.memory_space<vmem>>, vector<56x128xf32>,
    return
  }
  func.func @transform_0(%arg0: i32) -> (i32, i32) {
    %c0_i32 = arith.constant 0 : i32
    %c0_i32_0 = arith.constant 0 : i32
    return %arg0, %c0_i32 : i32, i32
  }
  func.func @transform_1(%arg0: i32) -> (i32, i32, i32) {
    %c0_i32 = arith.constant 0 : i32
    %c0_i32_0 = arith.constant 0 : i32
    %c0_i32_1 = arith.constant 0 : i32
    %c0_i32_2 = arith.constant 0 : i32
    return %c0_i32, %c0_i32_0, %c0_i32_1 : i32, i32, i32
  }
  func.func @transform_2(%arg0: i32) -> (i32, i32) {
    %c0_i32 = arith.constant 0 : i32
    %c0_i32_0 = arith.constant 0 : i32
    %c0_i32_1 = arith.constant 0 : i32
    return %c0_i32, %c0_i32_0 : i32, i32
  }
  func.func @transform_3(%arg0: i32) -> (i32, i32) {
    %c0_i32 = arith.constant 0 : i32
    %c0_i32_0 = arith.constant 0 : i32
    %c0_i32_1 = arith.constant 0 : i32
    return %c0_i32, %c0_i32_0 : i32, i32
  }
  func.func @transform_4(%arg0: i32) -> (i32, i32) {
    %c0_i32 = arith.constant 0 : i32
    %c0_i32_0 = arith.constant 0 : i32
    return %arg0, %c0_i32 : i32, i32
  }
}

</mosaic_0001>

<llo_original>
// kernel: embedding_forward_batched.1
$region0: #{embedding_forward_batched.1}
  #allocation0 [shape = 'u32[]', space=smem, size = 0x4, offset = 0x4, fixed_abs, tag = 'smem constant byte address 0x4 - core index']
  #allocation1 [shape = 'u32[144,128]{1,0:T(1,128)}', space=vmem, size = 0x12000, scoped, tag = 'internal scratch']
  %s0 = inlined_call_operand.vmem [shape: f32[56,164], index: 0, kind: input, shape index: {}]
  %s1 = inlined_call_operand.vmem [shape: f32[3,164,256], index: 1, kind: input, shape index: {}]
  %s2 = inlined_call_operand.hbm [shape: f32[256,128], index: 2, kind: input, shape index: {}]
  %s3 = inlined_call_operand.vmem [shape: f32[1,128], index: 3, kind: input, shape index: {}]
  %s4 = inlined_call_operand.vmem [shape: f32[56,128], index: 4, kind: output, shape index: {}]
  %s5 = sld [smem:[#allocation0]]
  $region30: #{embedding_forward_batched.1} parent=0
    _
  %s7 = ssub.s32 1, %s5
  %s8 = scalar_select 0, %s7, %s5
  $region1: #{embedding_forward_batched.1} parent=0
    #allocation2 [shape = 'u8[131072]{0}', space=vmem, size = 0x20000, scoped, tag = 'input window, operand 2, single buffered']
    #allocation3 [shape = 's32[1]{0}', space=sflag, size = 0x4, scoped, tag = 'scoped memory for embedding_forward_batched.1']
    %9 = vsyncpa [#allocation3], 0
    // Predicated region
    $region2: #{embedding_forward_batched.1} parent=1 // pred_check
      _
    $region3: #{embedding_forward_batched.1} parent=1 // pred_check_branch
      %11 = sbr.rel (0) target = $region5
    $region4: #{embedding_forward_batched.1} parent=1 // pred_region
      _
    $region5: #{embedding_forward_batched.1} parent=1 // pred_fallthru
      _
    // Predicated region
    $region6: #{embedding_forward_batched.1} parent=1 // pred_check
      _
    $region7: #{embedding_forward_batched.1} parent=1 // pred_check_branch
      %13 = sbr.rel (0) target = $region9
    $region8: #{embedding_forward_batched.1} parent=1 // pred_region
      _
    $region9: #{embedding_forward_batched.1} parent=1 // pred_fallthru
      _
    // Predicated region
    $region10: #{embedding_forward_batched.1} parent=1 // pred_check
      _
    $region11: #{embedding_forward_batched.1} parent=1 // pred_check_branch
      %15 = sbr.rel (0) target = $region13
    $region12: #{embedding_forward_batched.1} parent=1 // pred_region
      %s17 = ssub.s32 4096, 4096
      %18 = vsyncadd [#allocation3], %s17
      %s19 = sshll.u32 [#allocation2], 4
      %s20 = int_to_ptr.vmem [resolvable:$true] %s19
      %25 = dma.hbm_to_vmem [thread:$0]  %s2, 4096, %s20, [#allocation3], 128, 128, 8
    $region13: #{embedding_forward_batched.1} parent=1 // pred_fallthru
      _
    // Predicated region
    $region14: #{embedding_forward_batched.1} parent=1 // pred_check
      _
    $region15: #{embedding_forward_batched.1} parent=1 // pred_check_branch
      %27 = sbr.rel (0) target = $region17
    $region16: #{embedding_forward_batched.1} parent=1 // pred_region
      _
    $region17: #{embedding_forward_batched.1} parent=1 // pred_fallthru
      _
    // Predicated region
    $region18: #{embedding_forward_batched.1} parent=1 // pred_check
      _
    $region19: #{embedding_forward_batched.1} parent=1 // pred_check_branch
      %29 = sbr.rel (0) target = $region21
    $region20: #{embedding_forward_batched.1} parent=1 // pred_region
      %30 = dma.done [#allocation3], 4096
    $region21: #{embedding_forward_batched.1} parent=1 // pred_fallthru
      _
    %v31 = vld [vmem:[%s0] sm:$0xff]
    %v32 = vld [vmem:[%s0 + $0x8] sm:$0xff]
    %v33 = vld [vmem:[%s0 + $0x10] sm:$0xff]
    %v34 = vld [vmem:[%s0 + $0x18] sm:$0xff]
    %v35 = vld [vmem:[%s0 + $0x20] sm:$0xff]
    %v36 = vld [vmem:[%s0 + $0x28] sm:$0xff]
    %v37 = vld [vmem:[%s0 + $0x30] sm:$0xff]
    %v38 = vld [vmem:[%s0 + $0x38] sm:$0xff]
    %v39 = vld [vmem:[%s0 + $0x40] sm:$0xff]
    %v40 = vld [vmem:[%s0 + $0x48] sm:$0xff]
    %v41 = vld [vmem:[%s0 + $0x50] sm:$0xff]
    %v42 = vld [vmem:[%s0 + $0x58] sm:$0xff]
    %v43 = vld [vmem:[%s0 + $0x60] sm:$0xff]
    %v44 = vld [vmem:[%s0 + $0x68] sm:$0xff]
    %v45 = vld [vmem:[%s1] sm:$0xff]
    %v46 = vld [vmem:[%s1 + $0x8] sm:$0xff]
    %v47 = vld [vmem:[%s1 + $0x10] sm:$0xff]
    %v48 = vld [vmem:[%s1 + $0x18] sm:$0xff]
    %v49 = vld [vmem:[%s1 + $0x20] sm:$0xff]
    %v50 = vld [vmem:[%s1 + $0x28] sm:$0xff]
    %v51 = vld [vmem:[%s1 + $0x30] sm:$0xff]
    %v52 = vld [vmem:[%s1 + $0x38] sm:$0xff]
    %v53 = vld [vmem:[%s1 + $0x40] sm:$0xff]
    %v54 = vld [vmem:[%s1 + $0x48] sm:$0xff]
    %v55 = vld [vmem:[%s1 + $0x50] sm:$0xff]
    %v56 = vld [vmem:[%s1 + $0x58] sm:$0xff]
    %v57 = vld [vmem:[%s1 + $0x60] sm:$0xff]
    %v58 = vld [vmem:[%s1 + $0x68] sm:$0xff]
    %v59 = vld [vmem:[%s1 + $0x70] sm:$0xff]
    %v60 = vld [vmem:[%s1 + $0x78] sm:$0xff]
    %v61 = vld [vmem:[%s1 + $0x80] sm:$0xff]
    %v62 = vld [vmem:[%s1 + $0x88] sm:$0xff]
    %v63 = vld [vmem:[%s1 + $0x90] sm:$0xff]
    %v64 = vld [vmem:[%s1 + $0x98] sm:$0xff]
    %v65 = vld [vmem:[%s1 + $0xa0] sm:$0xff]
    %v66 = vld [vmem:[%s1 + $0xa8] sm:$0xff]
    %v67 = vld [vmem:[%s1 + $0xb0] sm:$0xff]
    %v68 = vld [vmem:[%s1 + $0xb8] sm:$0xff]
    %v69 = vld [vmem:[%s1 + $0xc0] sm:$0xff]
    %v70 = vld [vmem:[%s1 + $0xc8] sm:$0xff]
    %v71 = vld [vmem:[%s1 + $0xd0] sm:$0xff]
    %v72 = vld [vmem:[%s1 + $0xd8] sm:$0xff]
    %v73 = vld [vmem:[%s1 + $0xe0] sm:$0xff]
    %v74 = vld [vmem:[%s1 + $0xe8] sm:$0xff]
    %v75 = vld [vmem:[%s1 + $0xf0] sm:$0xff]
    %v76 = vld [vmem:[%s1 + $0xf8] sm:$0xff]
    %v77 = vld [vmem:[%s1 + $0x100] sm:$0xff]
    %v78 = vld [vmem:[%s1 + $0x108] sm:$0xff]
    %v79 = vld [vmem:[%s1 + $0x110] sm:$0xff]
    %v80 = vld [vmem:[%s1 + $0x118] sm:$0xff]
    %v81 = vld [vmem:[%s1 + $0x120] sm:$0xff]
    %v82 = vld [vmem:[%s1 + $0x128] sm:$0xff]
    %v83 = vld [vmem:[%s1 + $0x130] sm:$0xff]
    %v84 = vld [vmem:[%s1 + $0x138] sm:$0xff]
    %v85 = vld [vmem:[%s1 + $0x140] sm:$0xf]
    %v86 = vld [vmem:[%s1 + $0x148] sm:$0xf]
    %vm87 = vcmask 293888
    %v89 = vsel %vm87, %v32, 0
    %v92 = vsel %vm87, %v34, 0
    %v95 = vsel %vm87, %v36, 0
    %v98 = vsel %vm87, %v38, 0
    %v101 = vsel %vm87, %v40, 0
    %v104 = vsel %vm87, %v42, 0
    %v107 = vsel %vm87, %v44, 0
    %vm109 = vcmask 1043456
    %v111 = vsel %vm109, %v85, 0
    %v114 = vsel %vm109, %v86, 0
    %116 = vmatprep.subr.mxu0 %v46
    %117 = vmatpush1.msra.mxu0 %v45
    %118 = vmatprep.subr.mxu0 %v48
    %119 = vmatpush1.msra.mxu0 %v47
    %120 = vmatprep.subr.mxu0 %v50
    %121 = vmatpush1.msra.mxu0 %v49
    %122 = vmatprep.subr.mxu0 %v52
    %123 = vmatpush1.msra.mxu0 %v51
    %124 = vmatprep.subr.mxu0 %v54
    %125 = vmatpush1.msra.mxu0 %v53
    %126 = vmatprep.subr.mxu0 %v56
    %127 = vmatpush1.msra.mxu0 %v55
    %128 = vmatprep.subr.mxu0 %v58
    %129 = vmatpush1.msra.mxu0 %v57
    %130 = vmatprep.subr.mxu0 %v60
    %131 = vmatpush1.msra.mxu0 %v59
    %132 = vmatprep.subr.mxu0 %v62
    %133 = vmatpush1.msra.mxu0 %v61
    %134 = vmatprep.subr.mxu0 %v64
    %135 = vmatpush1.msra.mxu0 %v63
    %136 = vmatprep.subr.mxu0 %v66
    %137 = vmatpush1.msra.mxu0 %v65
    %138 = vmatprep.subr.mxu0 %v68
    %139 = vmatpush1.msra.mxu0 %v67
    %140 = vmatprep.subr.mxu0 %v70
    %141 = vmatpush1.msra.mxu0 %v69
    %142 = vmatprep.subr.mxu0 %v72
    %143 = vmatpush1.msra.mxu0 %v71
    %144 = vmatprep.subr.mxu0 %v74
    %145 = vmatpush1.msra.mxu0 %v73
    %146 = vmatprep.subr.mxu0 %v76
    %147 = vmatpush1.msra.mxu0 %v75
    %148 = vmatprep.subr.mxu0 %v78
    %149 = vmatpush1.msra.mxu0 %v77
    %150 = vmatprep.subr.mxu0 %v80
    %151 = vmatpush1.msra.mxu0 %v79
    %152 = vmatprep.subr.mxu0 %v82
    %153 = vmatpush1.msra.mxu0 %v81
    %154 = vmatprep.subr.mxu0 %v84
    %155 = vmatpush1.msra.mxu0 %v83
    %156 = vmatprep.subr.mxu0 %v114
    %157 = vmatpush1.msra.mxu0 %v111
    %158 = vmatprep.subr.mxu0 0.0
    %159 = vmatpush1.msra.mxu0 0.0
    %160 = vmatprep.subr.mxu0 0.0
    %161 = vmatpush1.msra.mxu0 0.0
    %162 = vmatprep.subr.mxu0 0.0
    %163 = vmatpush1.msra.mxu0 0.0
    %164 = vmatprep.subr.mxu0 0.0
    %165 = vmatpush1.msra.mxu0 0.0
    %166 = vmatprep.subr.mxu0 0.0
    %167 = vmatpush1.msra.mxu0 0.0
    %168 = vmatprep.subr.mxu0 0.0
    %169 = vmatpush1.msra.mxu0 0.0
    %170 = vmatprep.subr.mxu0 0.0
    %171 = vmatpush1.msra.mxu0 0.0
    %172 = vmatprep.subr.mxu0 0.0
    %173 = vmatpush1.msra.mxu0 0.0
    %174 = vmatprep.subr.mxu0 0.0
    %175 = vmatpush1.msra.mxu0 0.0
    %176 = vmatprep.subr.mxu0 0.0
    %177 = vmatpush1.msra.mxu0 0.0
    %178 = vmatprep.subr.mxu0 0.0
    %179 = vmatpush1.msra.mxu0 0.0
    %180 = vmatprep.mubr.f32.mxu0 %v89
    %181 = vmatmul.mubr.f32.gmra.mrb[0].mxu0 %v31
    %v182 = vpop.f32.mrb[0].mxu0
    %v183 = vadd.f32 0.0, %v182
    %v184 = vpop.f32.mrb[0].mxu0
    %v185 = vadd.f32 0.0, %v184
    %186 = vmatprep.mubr.f32.mxu0 %v92
    %187 = vmatmul.mubr.f32.gmra.mrb[0].mxu0 %v33
    %v188 = vpop.f32.mrb[0].mxu0
    %v189 = vadd.f32 0.0, %v188
    %v190 = vpop.f32.mrb[0].mxu0
    %v191 = vadd.f32 0.0, %v190
    %192 = vmatprep.mubr.f32.mxu0 %v95
    %193 = vmatmul.mubr.f32.gmra.mrb[0].mxu0 %v35
    %v194 = vpop.f32.mrb[0].mxu0
    %v195 = vadd.f32 0.0, %v194
    %v196 = vpop.f32.mrb[0].mxu0
    %v197 = vadd.f32 0.0, %v196
    %198 = vmatprep.mubr.f32.mxu0 %v98
    %199 = vmatmul.mubr.f32.gmra.mrb[0].mxu0 %v37
    %v200 = vpop.f32.mrb[0].mxu0
    %v201 = vadd.f32 0.0, %v200
    %v202 = vpop.f32.mrb[0].mxu0
    %v203 = vadd.f32 0.0, %v202
    %204 = vmatprep.mubr.f32.mxu0 %v101
    %205 = vmatmul.mubr.f32.gmra.mrb[0].mxu0 %v39
    %v206 = vpop.f32.mrb[0].mxu0
    %v207 = vadd.f32 0.0, %v206
    %v208 = vpop.f32.mrb[0].mxu0
    %v209 = vadd.f32 0.0, %v208
    %210 = vmatprep.mubr.f32.mxu0 %v104
    %211 = vmatmul.mubr.f32.gmra.mrb[0].mxu0 %v41
    %v212 = vpop.f32.mrb[0].mxu0
    %v213 = vadd.f32 0.0, %v212
    %v214 = vpop.f32.mrb[0].mxu0
    %v215 = vadd.f32 0.0, %v214
    %216 = vmatprep.mubr.f32.mxu0 %v107
    %217 = vmatmul.mubr.f32.gmra.mrb[0].mxu0 %v43
    %v218 = vpop.f32.mrb[0].mxu0
    %v219 = vadd.f32 0.0, %v218
    %v220 = vpop.f32.mrb[0].mxu0
    %v221 = vadd.f32 0.0, %v220
    %222 = vdwg.mxu0
    %v223 = vxor.u32 %v183, 2147483648
    %v224 = vxor.u32 %v185, 2147483648
    %v225 = vxor.u32 %v189, 2147483648
    %v226 = vxor.u32 %v191, 2147483648
    %v227 = vxor.u32 %v195, 2147483648
    %v228 = vxor.u32 %v197, 2147483648
    %v229 = vxor.u32 %v201, 2147483648
    %v230 = vxor.u32 %v203, 2147483648
    %v231 = vxor.u32 %v207, 2147483648
    %v232 = vxor.u32 %v209, 2147483648
    %v233 = vxor.u32 %v213, 2147483648
    %v234 = vxor.u32 %v215, 2147483648
    %v235 = vxor.u32 %v219, 2147483648
    %v236 = vxor.u32 %v221, 2147483648
    %v237 = vmul.f32 %v223, 1.442695
    %v238 = vpow.pop %v237
    %v239 = vmul.f32 %v224, 1.442695
    %v240 = vpow.pop %v239
    %v241 = vmul.f32 %v225, 1.442695
    %v242 = vpow.pop %v241
    %v243 = vmul.f32 %v226, 1.442695
    %v244 = vpow.pop %v243
    %v245 = vmul.f32 %v227, 1.442695
    %v246 = vpow.pop %v245
    %v247 = vmul.f32 %v228, 1.442695
    %v248 = vpow.pop %v247
    %v249 = vmul.f32 %v229, 1.442695
    %v250 = vpow.pop %v249
    %v251 = vmul.f32 %v230, 1.442695
    %v252 = vpow.pop %v251
    %v253 = vmul.f32 %v231, 1.442695
    %v254 = vpow.pop %v253
    %v255 = vmul.f32 %v232, 1.442695
    %v256 = vpow.pop %v255
    %v257 = vmul.f32 %v233, 1.442695
    %v258 = vpow.pop %v257
    %v259 = vmul.f32 %v234, 1.442695
    %v260 = vpow.pop %v259
    %v261 = vmul.f32 %v235, 1.442695
    %v262 = vpow.pop %v261
    %v263 = vmul.f32 %v236, 1.442695
    %v264 = vpow.pop %v263
    %v265 = vadd.f32 %v238, 1.0
    %v266 = vadd.f32 %v240, 1.0
    %v267 = vadd.f32 %v242, 1.0
    %v268 = vadd.f32 %v244, 1.0
    %v269 = vadd.f32 %v246, 1.0
    %v270 = vadd.f32 %v248, 1.0
    %v271 = vadd.f32 %v250, 1.0
    %v272 = vadd.f32 %v252, 1.0
    %v273 = vadd.f32 %v254, 1.0
    %v274 = vadd.f32 %v256, 1.0
    %v275 = vadd.f32 %v258, 1.0
    %v276 = vadd.f32 %v260, 1.0
    %v277 = vadd.f32 %v262, 1.0
    %v278 = vadd.f32 %v264, 1.0
    %v279 = vrcp.pop %v265
    %v280 = vmul.f32 1.0, %v279
    %v281 = vrcp.pop %v266
    %v282 = vmul.f32 1.0, %v281
    %v283 = vrcp.pop %v267
    %v284 = vmul.f32 1.0, %v283
    %v285 = vrcp.pop %v268
    %v286 = vmul.f32 1.0, %v285
    %v287 = vrcp.pop %v269
    %v288 = vmul.f32 1.0, %v287
    %v289 = vrcp.pop %v270
    %v290 = vmul.f32 1.0, %v289
    %v291 = vrcp.pop %v271
    %v292 = vmul.f32 1.0, %v291
    %v293 = vrcp.pop %v272
    %v294 = vmul.f32 1.0, %v293
    %v295 = vrcp.pop %v273
    %v296 = vmul.f32 1.0, %v295
    %v297 = vrcp.pop %v274
    %v298 = vmul.f32 1.0, %v297
    %v299 = vrcp.pop %v275
    %v300 = vmul.f32 1.0, %v299
    %v301 = vrcp.pop %v276
    %v302 = vmul.f32 1.0, %v301
    %v303 = vrcp.pop %v277
    %v304 = vmul.f32 1.0, %v303
    %v305 = vrcp.pop %v278
    %v306 = vmul.f32 1.0, %v305
    %s307 = scalar_lea.vmem %s1, 336
    %v308 = vld [vmem:[%s307] sm:$0xff]
    %v309 = vld [vmem:[%s307 + $0x8] sm:$0xff]
    %v310 = vld [vmem:[%s307 + $0x10] sm:$0xff]
    %v311 = vld [vmem:[%s307 + $0x18] sm:$0xff]
    %v312 = vld [vmem:[%s307 + $0x20] sm:$0xff]
    %v313 = vld [vmem:[%s307 + $0x28] sm:$0xff]
    %v314 = vld [vmem:[%s307 + $0x30] sm:$0xff]
    %v315 = vld [vmem:[%s307 + $0x38] sm:$0xff]
    %v316 = vld [vmem:[%s307 + $0x40] sm:$0xff]
    %v317 = vld [vmem:[%s307 + $0x48] sm:$0xff]
    %v318 = vld [vmem:[%s307 + $0x50] sm:$0xff]
    %v319 = vld [vmem:[%s307 + $0x58] sm:$0xff]
    %v320 = vld [vmem:[%s307 + $0x60] sm:$0xff]
    %v321 = vld [vmem:[%s307 + $0x68] sm:$0xff]
    %v322 = vld [vmem:[%s307 + $0x70] sm:$0xff]
    %v323 = vld [vmem:[%s307 + $0x78] sm:$0xff]
    %v324 = vld [vmem:[%s307 + $0x80] sm:$0xff]
    %v325 = vld [vmem:[%s307 + $0x88] sm:$0xff]
    %v326 = vld [vmem:[%s307 + $0x90] sm:$0xff]
    %v327 = vld [vmem:[%s307 + $0x98] sm:$0xff]
    %v328 = vld [vmem:[%s307 + $0xa0] sm:$0xff]
    %v329 = vld [vmem:[%s307 + $0xa8] sm:$0xff]
    %v330 = vld [vmem:[%s307 + $0xb0] sm:$0xff]
    %v331 = vld [vmem:[%s307 + $0xb8] sm:$0xff]
    %v332 = vld [vmem:[%s307 + $0xc0] sm:$0xff]
    %v333 = vld [vmem:[%s307 + $0xc8] sm:$0xff]
    %v334 = vld [vmem:[%s307 + $0xd0] sm:$0xff]
    %v335 = vld [vmem:[%s307 + $0xd8] sm:$0xff]
    %v336 = vld [vmem:[%s307 + $0xe0] sm:$0xff]
    %v337 = vld [vmem:[%s307 + $0xe8] sm:$0xff]
    %v338 = vld [vmem:[%s307 + $0xf0] sm:$0xff]
    %v339 = vld [vmem:[%s307 + $0xf8] sm:$0xff]
    %v340 = vld [vmem:[%s307 + $0x100] sm:$0xff]
    %v341 = vld [vmem:[%s307 + $0x108] sm:$0xff]
    %v342 = vld [vmem:[%s307 + $0x110] sm:$0xff]
    %v343 = vld [vmem:[%s307 + $0x118] sm:$0xff]
    %v344 = vld [vmem:[%s307 + $0x120] sm:$0xff]
    %v345 = vld [vmem:[%s307 + $0x128] sm:$0xff]
    %v346 = vld [vmem:[%s307 + $0x130] sm:$0xff]
    %v347 = vld [vmem:[%s307 + $0x138] sm:$0xff]
    %v348 = vld [vmem:[%s307 + $0x140] sm:$0xf]
    %v349 = vld [vmem:[%s307 + $0x148] sm:$0xf]
    %v351 = vsel %vm109, %v348, 0
    %v354 = vsel %vm109, %v349, 0
    %356 = vmatprep.subr.mxu0 %v309
    %357 = vmatpush1.msra.mxu0 %v308
    %358 = vmatprep.subr.mxu0 %v311
    %359 = vmatpush1.msra.mxu0 %v310
    %360 = vmatprep.subr.mxu0 %v313
    %361 = vmatpush1.msra.mxu0 %v312
    %362 = vmatprep.subr.mxu0 %v315
    %363 = vmatpush1.msra.mxu0 %v314
    %364 = vmatprep.subr.mxu0 %v317
    %365 = vmatpush1.msra.mxu0 %v316
    %366 = vmatprep.subr.mxu0 %v319
    %367 = vmatpush1.msra.mxu0 %v318
    %368 = vmatprep.subr.mxu0 %v321
    %369 = vmatpush1.msra.mxu0 %v320
    %370 = vmatprep.subr.mxu0 %v323
    %371 = vmatpush1.msra.mxu0 %v322
    %372 = vmatprep.subr.mxu0 %v325
    %373 = vmatpush1.msra.mxu0 %v324
    %374 = vmatprep.subr.mxu0 %v327
    %375 = vmatpush1.msra.mxu0 %v326
    %376 = vmatprep.subr.mxu0 %v329
    %377 = vmatpush1.msra.mxu0 %v328
    %378 = vmatprep.subr.mxu0 %v331
    %379 = vmatpush1.msra.mxu0 %v330
    %380 = vmatprep.subr.mxu0 %v333
    %381 = vmatpush1.msra.mxu0 %v332
    %382 = vmatprep.subr.mxu0 %v335
    %383 = vmatpush1.msra.mxu0 %v334
    %384 = vmatprep.subr.mxu0 %v337
    %385 = vmatpush1.msra.mxu0 %v336
    %386 = vmatprep.subr.mxu0 %v339
    %387 = vmatpush1.msra.mxu0 %v338
    %388 = vmatprep.subr.mxu0 %v341
    %389 = vmatpush1.msra.mxu0 %v340
    %390 = vmatprep.subr.mxu0 %v343
    %391 = vmatpush1.msra.mxu0 %v342
    %392 = vmatprep.subr.mxu0 %v345
    %393 = vmatpush1.msra.mxu0 %v344
    %394 = vmatprep.subr.mxu0 %v347
    %395 = vmatpush1.msra.mxu0 %v346
    %396 = vmatprep.subr.mxu0 %v354
    %397 = vmatpush1.msra.mxu0 %v351
    %398 = vmatprep.subr.mxu0 0.0
    %399 = vmatpush1.msra.mxu0 0.0
    %400 = vmatprep.subr.mxu0 0.0
    %401 = vmatpush1.msra.mxu0 0.0
    %402 = vmatprep.subr.mxu0 0.0
    %403 = vmatpush1.msra.mxu0 0.0
    %404 = vmatprep.subr.mxu0 0.0
    %405 = vmatpush1.msra.mxu0 0.0
    %406 = vmatprep.subr.mxu0 0.0
    %407 = vmatpush1.msra.mxu0 0.0
    %408 = vmatprep.subr.mxu0 0.0
    %409 = vmatpush1.msra.mxu0 0.0
    %410 = vmatprep.subr.mxu0 0.0
    %411 = vmatpush1.msra.mxu0 0.0
    %412 = vmatprep.subr.mxu0 0.0
    %413 = vmatpush1.msra.mxu0 0.0
    %414 = vmatprep.subr.mxu0 0.0
    %415 = vmatpush1.msra.mxu0 0.0
    %416 = vmatprep.subr.mxu0 0.0
    %417 = vmatpush1.msra.mxu0 0.0
    %418 = vmatprep.subr.mxu0 0.0
    %419 = vmatpush1.msra.mxu0 0.0
    %420 = vmatprep.mubr.f32.mxu0 %v89
    %421 = vmatmul.mubr.f32.gmra.mrb[0].mxu0 %v31
    %v422 = vpop.f32.mrb[0].mxu0
    %v423 = vadd.f32 0.0, %v422
    %v424 = vpop.f32.mrb[0].mxu0
    %v425 = vadd.f32 0.0, %v424
    %426 = vmatprep.mubr.f32.mxu0 %v92
    %427 = vmatmul.mubr.f32.gmra.mrb[0].mxu0 %v33
    %v428 = vpop.f32.mrb[0].mxu0
    %v429 = vadd.f32 0.0, %v428
    %v430 = vpop.f32.mrb[0].mxu0
    %v431 = vadd.f32 0.0, %v430
    %432 = vmatprep.mubr.f32.mxu0 %v95
    %433 = vmatmul.mubr.f32.gmra.mrb[0].mxu0 %v35
    %v434 = vpop.f32.mrb[0].mxu0
    %v435 = vadd.f32 0.0, %v434
    %v436 = vpop.f32.mrb[0].mxu0
    %v437 = vadd.f32 0.0, %v436
    %438 = vmatprep.mubr.f32.mxu0 %v98
    %439 = vmatmul.mubr.f32.gmra.mrb[0].mxu0 %v37
    %v440 = vpop.f32.mrb[0].mxu0
    %v441 = vadd.f32 0.0, %v440
    %v442 = vpop.f32.mrb[0].mxu0
    %v443 = vadd.f32 0.0, %v442
    %444 = vmatprep.mubr.f32.mxu0 %v101
    %445 = vmatmul.mubr.f32.gmra.mrb[0].mxu0 %v39
    %v446 = vpop.f32.mrb[0].mxu0
    %v447 = vadd.f32 0.0, %v446
    %v448 = vpop.f32.mrb[0].mxu0
    %v449 = vadd.f32 0.0, %v448
    %450 = vmatprep.mubr.f32.mxu0 %v104
    %451 = vmatmul.mubr.f32.gmra.mrb[0].mxu0 %v41
    %v452 = vpop.f32.mrb[0].mxu0
    %v453 = vadd.f32 0.0, %v452
    %v454 = vpop.f32.mrb[0].mxu0
    %v455 = vadd.f32 0.0, %v454
    %456 = vmatprep.mubr.f32.mxu0 %v107
    %457 = vmatmul.mubr.f32.gmra.mrb[0].mxu0 %v43
    %v458 = vpop.f32.mrb[0].mxu0
    %v459 = vadd.f32 0.0, %v458
    %v460 = vpop.f32.mrb[0].mxu0
    %v461 = vadd.f32 0.0, %v460
    %462 = vdwg.mxu0
    %v463 = vtanh.pop %v423
    %v464 = vtanh.pop %v425
    %v465 = vtanh.pop %v429
    %v466 = vtanh.pop %v431
    %v467 = vtanh.pop %v435
    %v468 = vtanh.pop %v437
    %v469 = vtanh.pop %v441
    %v470 = vtanh.pop %v443
    %v471 = vtanh.pop %v447
    %v472 = vtanh.pop %v449
    %v473 = vtanh.pop %v453
    %v474 = vtanh.pop %v455
    %v475 = vtanh.pop %v459
    %v476 = vtanh.pop %v461
    %s477 = scalar_lea.vmem %s1, 672
    %v478 = vld [vmem:[%s477] sm:$0xff]
    %v479 = vld [vmem:[%s477 + $0x8] sm:$0xff]
    %v480 = vld [vmem:[%s477 + $0x10] sm:$0xff]
    %v481 = vld [vmem:[%s477 + $0x18] sm:$0xff]
    %v482 = vld [vmem:[%s477 + $0x20] sm:$0xff]
    %v483 = vld [vmem:[%s477 + $0x28] sm:$0xff]
    %v484 = vld [vmem:[%s477 + $0x30] sm:$0xff]
    %v485 = vld [vmem:[%s477 + $0x38] sm:$0xff]
    %v486 = vld [vmem:[%s477 + $0x40] sm:$0xff]
    %v487 = vld [vmem:[%s477 + $0x48] sm:$0xff]
    %v488 = vld [vmem:[%s477 + $0x50] sm:$0xff]
    %v489 = vld [vmem:[%s477 + $0x58] sm:$0xff]
    %v490 = vld [vmem:[%s477 + $0x60] sm:$0xff]
    %v491 = vld [vmem:[%s477 + $0x68] sm:$0xff]
    %v492 = vld [vmem:[%s477 + $0x70] sm:$0xff]
    %v493 = vld [vmem:[%s477 + $0x78] sm:$0xff]
    %v494 = vld [vmem:[%s477 + $0x80] sm:$0xff]
    %v495 = vld [vmem:[%s477 + $0x88] sm:$0xff]
    %v496 = vld [vmem:[%s477 + $0x90] sm:$0xff]
    %v497 = vld [vmem:[%s477 + $0x98] sm:$0xff]
    %v498 = vld [vmem:[%s477 + $0xa0] sm:$0xff]
    %v499 = vld [vmem:[%s477 + $0xa8] sm:$0xff]
    %v500 = vld [vmem:[%s477 + $0xb0] sm:$0xff]
    %v501 = vld [vmem:[%s477 + $0xb8] sm:$0xff]
    %v502 = vld [vmem:[%s477 + $0xc0] sm:$0xff]
    %v503 = vld [vmem:[%s477 + $0xc8] sm:$0xff]
    %v504 = vld [vmem:[%s477 + $0xd0] sm:$0xff]
    %v505 = vld [vmem:[%s477 + $0xd8] sm:$0xff]
    %v506 = vld [vmem:[%s477 + $0xe0] sm:$0xff]
    %v507 = vld [vmem:[%s477 + $0xe8] sm:$0xff]
    %v508 = vld [vmem:[%s477 + $0xf0] sm:$0xff]
    %v509 = vld [vmem:[%s477 + $0xf8] sm:$0xff]
    %v510 = vld [vmem:[%s477 + $0x100] sm:$0xff]
    %v511 = vld [vmem:[%s477 + $0x108] sm:$0xff]
    %v512 = vld [vmem:[%s477 + $0x110] sm:$0xff]
    %v513 = vld [vmem:[%s477 + $0x118] sm:$0xff]
    %v514 = vld [vmem:[%s477 + $0x120] sm:$0xff]
    %v515 = vld [vmem:[%s477 + $0x128] sm:$0xff]
    %v516 = vld [vmem:[%s477 + $0x130] sm:$0xff]
    %v517 = vld [vmem:[%s477 + $0x138] sm:$0xff]
    %v518 = vld [vmem:[%s477 + $0x140] sm:$0xf]
    %v519 = vld [vmem:[%s477 + $0x148] sm:$0xf]
    %v521 = vsel %vm109, %v518, 0
    %v524 = vsel %vm109, %v519, 0
    %526 = vmatprep.subr.mxu0 %v479
    %527 = vmatpush1.msra.mxu0 %v478
    %528 = vmatprep.subr.mxu0 %v481
    %529 = vmatpush1.msra.mxu0 %v480
    %530 = vmatprep.subr.mxu0 %v483
    %531 = vmatpush1.msra.mxu0 %v482
    %532 = vmatprep.subr.mxu0 %v485
    %533 = vmatpush1.msra.mxu0 %v484
    %534 = vmatprep.subr.mxu0 %v487
    %535 = vmatpush1.msra.mxu0 %v486
    %536 = vmatprep.subr.mxu0 %v489
    %537 = vmatpush1.msra.mxu0 %v488
    %538 = vmatprep.subr.mxu0 %v491
    %539 = vmatpush1.msra.mxu0 %v490
    %540 = vmatprep.subr.mxu0 %v493
    %541 = vmatpush1.msra.mxu0 %v492
    %542 = vmatprep.subr.mxu0 %v495
    %543 = vmatpush1.msra.mxu0 %v494
    %544 = vmatprep.subr.mxu0 %v497
    %545 = vmatpush1.msra.mxu0 %v496
    %546 = vmatprep.subr.mxu0 %v499
    %547 = vmatpush1.msra.mxu0 %v498
    %548 = vmatprep.subr.mxu0 %v501
    %549 = vmatpush1.msra.mxu0 %v500
    %550 = vmatprep.subr.mxu0 %v503
    %551 = vmatpush1.msra.mxu0 %v502
    %552 = vmatprep.subr.mxu0 %v505
    %553 = vmatpush1.msra.mxu0 %v504
    %554 = vmatprep.subr.mxu0 %v507
    %555 = vmatpush1.msra.mxu0 %v506
    %556 = vmatprep.subr.mxu0 %v509
    %557 = vmatpush1.msra.mxu0 %v508
    %558 = vmatprep.subr.mxu0 %v511
    %559 = vmatpush1.msra.mxu0 %v510
    %560 = vmatprep.subr.mxu0 %v513
    %561 = vmatpush1.msra.mxu0 %v512
    %562 = vmatprep.subr.mxu0 %v515
    %563 = vmatpush1.msra.mxu0 %v514
    %564 = vmatprep.subr.mxu0 %v517
    %565 = vmatpush1.msra.mxu0 %v516
    %566 = vmatprep.subr.mxu0 %v524
    %567 = vmatpush1.msra.mxu0 %v521
    %568 = vmatprep.subr.mxu0 0.0
    %569 = vmatpush1.msra.mxu0 0.0
    %570 = vmatprep.subr.mxu0 0.0
    %571 = vmatpush1.msra.mxu0 0.0
    %572 = vmatprep.subr.mxu0 0.0
    %573 = vmatpush1.msra.mxu0 0.0
    %574 = vmatprep.subr.mxu0 0.0
    %575 = vmatpush1.msra.mxu0 0.0
    %576 = vmatprep.subr.mxu0 0.0
    %577 = vmatpush1.msra.mxu0 0.0
    %578 = vmatprep.subr.mxu0 0.0
    %579 = vmatpush1.msra.mxu0 0.0
    %580 = vmatprep.subr.mxu0 0.0
    %581 = vmatpush1.msra.mxu0 0.0
    %582 = vmatprep.subr.mxu0 0.0
    %583 = vmatpush1.msra.mxu0 0.0
    %584 = vmatprep.subr.mxu0 0.0
    %585 = vmatpush1.msra.mxu0 0.0
    %586 = vmatprep.subr.mxu0 0.0
    %587 = vmatpush1.msra.mxu0 0.0
    %588 = vmatprep.subr.mxu0 0.0
    %589 = vmatpush1.msra.mxu0 0.0
    %590 = vmatprep.mubr.f32.mxu0 %v89
    %591 = vmatmul.mubr.f32.gmra.mrb[0].mxu0 %v31
    %v592 = vpop.f32.mrb[0].mxu0
    %v593 = vadd.f32 0.0, %v592
    %v594 = vpop.f32.mrb[0].mxu0
    %v595 = vadd.f32 0.0, %v594
    %596 = vmatprep.mubr.f32.mxu0 %v92
    %597 = vmatmul.mubr.f32.gmra.mrb[0].mxu0 %v33
    %v598 = vpop.f32.mrb[0].mxu0
    %v599 = vadd.f32 0.0, %v598
    %v600 = vpop.f32.mrb[0].mxu0
    %v601 = vadd.f32 0.0, %v600
    %602 = vmatprep.mubr.f32.mxu0 %v95
    %603 = vmatmul.mubr.f32.gmra.mrb[0].mxu0 %v35
    %v604 = vpop.f32.mrb[0].mxu0
    %v605 = vadd.f32 0.0, %v604
    %v606 = vpop.f32.mrb[0].mxu0
    %v607 = vadd.f32 0.0, %v606
    %608 = vmatprep.mubr.f32.mxu0 %v98
    %609 = vmatmul.mubr.f32.gmra.mrb[0].mxu0 %v37
    %v610 = vpop.f32.mrb[0].mxu0
    %v611 = vadd.f32 0.0, %v610
    %v612 = vpop.f32.mrb[0].mxu0
    %v613 = vadd.f32 0.0, %v612
    %614 = vmatprep.mubr.f32.mxu0 %v101
    %615 = vmatmul.mubr.f32.gmra.mrb[0].mxu0 %v39
    %v616 = vpop.f32.mrb[0].mxu0
    %v617 = vadd.f32 0.0, %v616
    %v618 = vpop.f32.mrb[0].mxu0
    %v619 = vadd.f32 0.0, %v618
    %620 = vmatprep.mubr.f32.mxu0 %v104
    %621 = vmatmul.mubr.f32.gmra.mrb[0].mxu0 %v41
    %v622 = vpop.f32.mrb[0].mxu0
    %v623 = vadd.f32 0.0, %v622
    %v624 = vpop.f32.mrb[0].mxu0
    %v625 = vadd.f32 0.0, %v624
    %626 = vmatprep.mubr.f32.mxu0 %v107
    %627 = vmatmul.mubr.f32.gmra.mrb[0].mxu0 %v43
    %v628 = vpop.f32.mrb[0].mxu0
    %v629 = vadd.f32 0.0, %v628
    %v630 = vpop.f32.mrb[0].mxu0
    %v631 = vadd.f32 0.0, %v630
    %632 = vdwg.mxu0
    %v633 = vxor.u32 %v593, 2147483648
    %v634 = vxor.u32 %v595, 2147483648
    %v635 = vxor.u32 %v599, 2147483648
    %v636 = vxor.u32 %v601, 2147483648
    %v637 = vxor.u32 %v605, 2147483648
    %v638 = vxor.u32 %v607, 2147483648
    %v639 = vxor.u32 %v611, 2147483648
    %v640 = vxor.u32 %v613, 2147483648
    %v641 = vxor.u32 %v617, 2147483648
    %v642 = vxor.u32 %v619, 2147483648
    %v643 = vxor.u32 %v623, 2147483648
    %v644 = vxor.u32 %v625, 2147483648
    %v645 = vxor.u32 %v629, 2147483648
    %v646 = vxor.u32 %v631, 2147483648
    %v647 = vmul.f32 %v633, 1.442695
    %v648 = vpow.pop %v647
    %v649 = vmul.f32 %v634, 1.442695
    %v650 = vpow.pop %v649
    %v651 = vmul.f32 %v635, 1.442695
    %v652 = vpow.pop %v651
    %v653 = vmul.f32 %v636, 1.442695
    %v654 = vpow.pop %v653
    %v655 = vmul.f32 %v637, 1.442695
    %v656 = vpow.pop %v655
    %v657 = vmul.f32 %v638, 1.442695
    %v658 = vpow.pop %v657
    %v659 = vmul.f32 %v639, 1.442695
    %v660 = vpow.pop %v659
    %v661 = vmul.f32 %v640, 1.442695
    %v662 = vpow.pop %v661
    %v663 = vmul.f32 %v641, 1.442695
    %v664 = vpow.pop %v663
    %v665 = vmul.f32 %v642, 1.442695
    %v666 = vpow.pop %v665
    %v667 = vmul.f32 %v643, 1.442695
    %v668 = vpow.pop %v667
    %v669 = vmul.f32 %v644, 1.442695
    %v670 = vpow.pop %v669
    %v671 = vmul.f32 %v645, 1.442695
    %v672 = vpow.pop %v671
    %v673 = vmul.f32 %v646, 1.442695
    %v674 = vpow.pop %v673
    %v675 = vadd.f32 %v648, 1.0
    %v676 = vadd.f32 %v650, 1.0
    %v677 = vadd.f32 %v652, 1.0
    %v678 = vadd.f32 %v654, 1.0
    %v679 = vadd.f32 %v656, 1.0
    %v680 = vadd.f32 %v658, 1.0
    %v681 = vadd.f32 %v660, 1.0
    %v682 = vadd.f32 %v662, 1.0
    %v683 = vadd.f32 %v664, 1.0
    %v684 = vadd.f32 %v666, 1.0
    %v685 = vadd.f32 %v668, 1.0
    %v686 = vadd.f32 %v670, 1.0
    %v687 = vadd.f32 %v672, 1.0
    %v688 = vadd.f32 %v674, 1.0
    %v689 = vrcp.pop %v675
    %v690 = vmul.f32 1.0, %v689
    %v691 = vrcp.pop %v676
    %v692 = vmul.f32 1.0, %v691
    %v693 = vrcp.pop %v677
    %v694 = vmul.f32 1.0, %v693
    %v695 = vrcp.pop %v678
    %v696 = vmul.f32 1.0, %v695
    %v697 = vrcp.pop %v679
    %v698 = vmul.f32 1.0, %v697
    %v699 = vrcp.pop %v680
    %v700 = vmul.f32 1.0, %v699
    %v701 = vrcp.pop %v681
    %v702 = vmul.f32 1.0, %v701
    %v703 = vrcp.pop %v682
    %v704 = vmul.f32 1.0, %v703
    %v705 = vrcp.pop %v683
    %v706 = vmul.f32 1.0, %v705
    %v707 = vrcp.pop %v684
    %v708 = vmul.f32 1.0, %v707
    %v709 = vrcp.pop %v685
    %v710 = vmul.f32 1.0, %v709
    %v711 = vrcp.pop %v686
    %v712 = vmul.f32 1.0, %v711
    %v713 = vrcp.pop %v687
    %v714 = vmul.f32 1.0, %v713
    %v715 = vrcp.pop %v688
    %v716 = vmul.f32 1.0, %v715
    %v717 = vmul.f32 %v280, %v463
    %v718 = vmul.f32 %v282, %v464
    %v719 = vmul.f32 %v284, %v465
    %v720 = vmul.f32 %v286, %v466
    %v721 = vmul.f32 %v288, %v467
    %v722 = vmul.f32 %v290, %v468
    %v723 = vmul.f32 %v292, %v469
    %v724 = vmul.f32 %v294, %v470
    %v725 = vmul.f32 %v296, %v471
    %v726 = vmul.f32 %v298, %v472
    %v727 = vmul.f32 %v300, %v473
    %v728 = vmul.f32 %v302, %v474
    %v729 = vmul.f32 %v304, %v475
    %v730 = vmul.f32 %v306, %v476
    %v731 = vtanh.pop %v717
    %v732 = vtanh.pop %v718
    %v733 = vtanh.pop %v719
    %v734 = vtanh.pop %v720
    %v735 = vtanh.pop %v721
    %v736 = vtanh.pop %v722
    %v737 = vtanh.pop %v723
    %v738 = vtanh.pop %v724
    %v739 = vtanh.pop %v725
    %v740 = vtanh.pop %v726
    %v741 = vtanh.pop %v727
    %v742 = vtanh.pop %v728
    %v743 = vtanh.pop %v729
    %v744 = vtanh.pop %v730
    %v745 = vmul.f32 %v690, %v731
    %v746 = vmul.f32 %v692, %v732
    %v747 = vmul.f32 %v694, %v733
    %v748 = vmul.f32 %v696, %v734
    %v749 = vmul.f32 %v698, %v735
    %v750 = vmul.f32 %v700, %v736
    %v751 = vmul.f32 %v702, %v737
    %v752 = vmul.f32 %v704, %v738
    %v753 = vmul.f32 %v706, %v739
    %v754 = vmul.f32 %v708, %v740
    %v755 = vmul.f32 %v710, %v741
    %v756 = vmul.f32 %v712, %v742
    %v757 = vmul.f32 %v714, %v743
    %v758 = vmul.f32 %v716, %v744
    %v759 = vld [vmem:[#allocation2] sm:$0xff]
    %v760 = vld [vmem:[#allocation2 + $0x8] sm:$0xff]
    %v761 = vld [vmem:[#allocation2 + $0x10] sm:$0xff]
    %v762 = vld [vmem:[#allocation2 + $0x18] sm:$0xff]
    %v763 = vld [vmem:[#allocation2 + $0x20] sm:$0xff]
    %v764 = vld [vmem:[#allocation2 + $0x28] sm:$0xff]
    %v765 = vld [vmem:[#allocation2 + $0x30] sm:$0xff]
    %v766 = vld [vmem:[#allocation2 + $0x38] sm:$0xff]
    %v767 = vld [vmem:[#allocation2 + $0x40] sm:$0xff]
    %v768 = vld [vmem:[#allocation2 + $0x48] sm:$0xff]
    %v769 = vld [vmem:[#allocation2 + $0x50] sm:$0xff]
    %v770 = vld [vmem:[#allocation2 + $0x58] sm:$0xff]
    %v771 = vld [vmem:[#allocation2 + $0x60] sm:$0xff]
    %v772 = vld [vmem:[#allocation2 + $0x68] sm:$0xff]
    %v773 = vld [vmem:[#allocation2 + $0x70] sm:$0xff]
    %v774 = vld [vmem:[#allocation2 + $0x78] sm:$0xff]
    %v775 = vld [vmem:[#allocation2 + $0x80] sm:$0xff]
    %v776 = vld [vmem:[#allocation2 + $0x88] sm:$0xff]
    %v777 = vld [vmem:[#allocation2 + $0x90] sm:$0xff]
    %v778 = vld [vmem:[#allocation2 + $0x98] sm:$0xff]
    %v779 = vld [vmem:[#allocation2 + $0xa0] sm:$0xff]
    %v780 = vld [vmem:[#allocation2 + $0xa8] sm:$0xff]
    %v781 = vld [vmem:[#allocation2 + $0xb0] sm:$0xff]
    %v782 = vld [vmem:[#allocation2 + $0xb8] sm:$0xff]
    %v783 = vld [vmem:[#allocation2 + $0xc0] sm:$0xff]
    %v784 = vld [vmem:[#allocation2 + $0xc8] sm:$0xff]
    %v785 = vld [vmem:[#allocation2 + $0xd0] sm:$0xff]
    %v786 = vld [vmem:[#allocation2 + $0xd8] sm:$0xff]
    %v787 = vld [vmem:[#allocation2 + $0xe0] sm:$0xff]
    %v788 = vld [vmem:[#allocation2 + $0xe8] sm:$0xff]
    %v789 = vld [vmem:[#allocation2 + $0xf0] sm:$0xff]
    %v790 = vld [vmem:[#allocation2 + $0xf8] sm:$0xff]
    %v791 = vld [vmem:[%s3] sm:$0x1]
    %v793 = vlaneseq
    %v794 = vshrl.u32 %v793, 7
    %v795 = vsub.s32 0, %v794
    %v796 = vrot.slane %v791, %v795
    %798 = vmatprep.subr.mxu0 0.0
    %799 = vmatpush1.msra.mxu0 %v759
    %800 = vmatprep.subr.mxu0 0.0
    %801 = vmatpush1.msra.mxu0 %v760
    %802 = vmatprep.subr.mxu0 0.0
    %803 = vmatpush1.msra.mxu0 %v761
    %804 = vmatprep.subr.mxu0 0.0
    %805 = vmatpush1.msra.mxu0 %v762
    %806 = vmatprep.subr.mxu0 0.0
    %807 = vmatpush1.msra.mxu0 %v763
    %808 = vmatprep.subr.mxu0 0.0
    %809 = vmatpush1.msra.mxu0 %v764
    %810 = vmatprep.subr.mxu0 0.0
    %811 = vmatpush1.msra.mxu0 %v765
    %812 = vmatprep.subr.mxu0 0.0
    %813 = vmatpush1.msra.mxu0 %v766
    %814 = vmatprep.subr.mxu0 0.0
    %815 = vmatpush1.msra.mxu0 %v767
    %816 = vmatprep.subr.mxu0 0.0
    %817 = vmatpush1.msra.mxu0 %v768
    %818 = vmatprep.subr.mxu0 0.0
    %819 = vmatpush1.msra.mxu0 %v769
    %820 = vmatprep.subr.mxu0 0.0
    %821 = vmatpush1.msra.mxu0 %v770
    %822 = vmatprep.subr.mxu0 0.0
    %823 = vmatpush1.msra.mxu0 %v771
    %824 = vmatprep.subr.mxu0 0.0
    %825 = vmatpush1.msra.mxu0 %v772
    %826 = vmatprep.subr.mxu0 0.0
    %827 = vmatpush1.msra.mxu0 %v773
    %828 = vmatprep.subr.mxu0 0.0
    %829 = vmatpush1.msra.mxu0 %v774
    %830 = vmatprep.subr.mxu0 0.0
    %831 = vmatpush1.msra.mxu0 %v775
    %832 = vmatprep.subr.mxu0 0.0
    %833 = vmatpush1.msra.mxu0 %v776
    %834 = vmatprep.subr.mxu0 0.0
    %835 = vmatpush1.msra.mxu0 %v777
    %836 = vmatprep.subr.mxu0 0.0
    %837 = vmatpush1.msra.mxu0 %v778
    %838 = vmatprep.subr.mxu0 0.0
    %839 = vmatpush1.msra.mxu0 %v779
    %840 = vmatprep.subr.mxu0 0.0
    %841 = vmatpush1.msra.mxu0 %v780
    %842 = vmatprep.subr.mxu0 0.0
    %843 = vmatpush1.msra.mxu0 %v781
    %844 = vmatprep.subr.mxu0 0.0
    %845 = vmatpush1.msra.mxu0 %v782
    %846 = vmatprep.subr.mxu0 0.0
    %847 = vmatpush1.msra.mxu0 %v783
    %848 = vmatprep.subr.mxu0 0.0
    %849 = vmatpush1.msra.mxu0 %v784
    %850 = vmatprep.subr.mxu0 0.0
    %851 = vmatpush1.msra.mxu0 %v785
    %852 = vmatprep.subr.mxu0 0.0
    %853 = vmatpush1.msra.mxu0 %v786
    %854 = vmatprep.subr.mxu0 0.0
    %855 = vmatpush1.msra.mxu0 %v787
    %856 = vmatprep.subr.mxu0 0.0
    %857 = vmatpush1.msra.mxu0 %v788
    %858 = vmatprep.subr.mxu0 0.0
    %859 = vmatpush1.msra.mxu0 %v789
    %860 = vmatprep.subr.mxu0 0.0
    %861 = vmatpush1.msra.mxu0 %v790
    %862 = vmatprep.mubr.f32.mxu0 %v746
    %863 = vmatmul.mubr.f32.gmra.mrb[0].mxu0 %v745
    %v864 = vpop.f32.mrb[0].mxu0
    %v865 = vadd.f32 %v796, %v864
    %v866 = vpop.f32.mrb[0].mxu0
    %867 = vmatprep.mubr.f32.mxu0 %v748
    %868 = vmatmul.mubr.f32.gmra.mrb[0].mxu0 %v747
    %v869 = vpop.f32.mrb[0].mxu0
    %v870 = vadd.f32 %v796, %v869
    %v871 = vpop.f32.mrb[0].mxu0
    %872 = vmatprep.mubr.f32.mxu0 %v750
    %873 = vmatmul.mubr.f32.gmra.mrb[0].mxu0 %v749
    %v874 = vpop.f32.mrb[0].mxu0
    %v875 = vadd.f32 %v796, %v874
    %v876 = vpop.f32.mrb[0].mxu0
    %877 = vmatprep.mubr.f32.mxu0 %v752
    %878 = vmatmul.mubr.f32.gmra.mrb[0].mxu0 %v751
    %v879 = vpop.f32.mrb[0].mxu0
    %v880 = vadd.f32 %v796, %v879
    %v881 = vpop.f32.mrb[0].mxu0
    %882 = vmatprep.mubr.f32.mxu0 %v754
    %883 = vmatmul.mubr.f32.gmra.mrb[0].mxu0 %v753
    %v884 = vpop.f32.mrb[0].mxu0
    %v885 = vadd.f32 %v796, %v884
    %v886 = vpop.f32.mrb[0].mxu0
    %887 = vmatprep.mubr.f32.mxu0 %v756
    %888 = vmatmul.mubr.f32.gmra.mrb[0].mxu0 %v755
    %v889 = vpop.f32.mrb[0].mxu0
    %v890 = vadd.f32 %v796, %v889
    %v891 = vpop.f32.mrb[0].mxu0
    %892 = vmatprep.mubr.f32.mxu0 %v758
    %893 = vmatmul.mubr.f32.gmra.mrb[0].mxu0 %v757
    %v894 = vpop.f32.mrb[0].mxu0
    %v895 = vadd.f32 %v796, %v894
    %v896 = vpop.f32.mrb[0].mxu0
    %897 = vdwg.mxu0
    %v898 = vtanh.pop %v865
    %v899 = vtanh.pop %v870
    %v900 = vtanh.pop %v875
    %v901 = vtanh.pop %v880
    %v902 = vtanh.pop %v885
    %v903 = vtanh.pop %v890
    %v904 = vtanh.pop %v895
    %905 = vst [vmem:[%s4] sm:$0xff] %v898
    %906 = vst [vmem:[%s4 + $0x8] sm:$0xff] %v899
    %907 = vst [vmem:[%s4 + $0x10] sm:$0xff] %v900
    %908 = vst [vmem:[%s4 + $0x18] sm:$0xff] %v901
    %909 = vst [vmem:[%s4 + $0x20] sm:$0xff] %v902
    %910 = vst [vmem:[%s4 + $0x28] sm:$0xff] %v903
    %911 = vst [vmem:[%s4 + $0x30] sm:$0xff] %v904
    // Predicated region
    $region22: #{embedding_forward_batched.1} parent=1 // pred_check
      _
    $region23: #{embedding_forward_batched.1} parent=1 // pred_check_branch
      %913 = sbr.rel (0) target = $region25
    $region24: #{embedding_forward_batched.1} parent=1 // pred_region
      _
    $region25: #{embedding_forward_batched.1} parent=1 // pred_fallthru
      _
    // Predicated region
    $region26: #{embedding_forward_batched.1} parent=1 // pred_check
      _
    $region27: #{embedding_forward_batched.1} parent=1 // pred_check_branch
      %915 = sbr.rel (0) target = $region29
    $region28: #{embedding_forward_batched.1} parent=1 // pred_region
      _
    $region29: #{embedding_forward_batched.1} parent=1 // pred_fallthru
      _
    %916 = vsyncpa [#allocation3], 1

</llo_original>
